<compile_context>
chip_gen: v7x
topology: tpu7x:2x2x1
jax: 0.10.0
libtpu: 0.0.40
codegen_flags: <defaults>
</compile_context>

<pallas_src>
import jax
import jax.numpy as jnp
from jax import lax
from jax.experimental import pallas as pl
from jax.experimental.pallas import tpu as pltpu


def aggregator_max_kernel(hs_ref, bias_ref, w1_ref, w2_ref, o_ref):
    TB, S, D = hs_ref.shape
    NH = w2_ref.shape[1]

    # Single bf16 load of the hidden-states tile; reused by both matmuls.
    hs_bf = hs_ref[...]                                              # [TB, S, D] bf16

    # Scorer is token-wise: flatten the batch tile into the MXU M dimension.
    # (S % 8 == 0 is asserted in the wrapper so the collapse does not cross
    # (sublane, lane) tiles.)
    h = jnp.tanh(jnp.dot(hs_bf.reshape(TB * S, D), w1_ref[...],
                         preferred_element_type=jnp.float32))        # [TB*S, Hh] f32
    logits = jnp.dot(h.astype(jnp.bfloat16), w2_ref[...],
                     preferred_element_type=jnp.float32)             # [TB*S, NH] f32
    logits = logits.reshape(TB, S, NH) + bias_ref[...]               # bias bcast over NH lanes

    # Block-wide softmax over seq (sublane axis), f32 transcendentals
    # (v5e EUP/VPU have no bf16 path); reciprocal goes to the EUP slot.
    m = jnp.max(logits, axis=1, keepdims=True)                       # [TB, 1, NH]
    e = jnp.exp(logits - m)                                          # [TB, S, NH]
    attn = e * pl.reciprocal(jnp.sum(e, axis=1, keepdims=True), approx=True)

    # One batched aggregation matmul: batch dim TB, contract seq.
    agg = lax.dot_general(
        attn.astype(jnp.bfloat16), hs_bf,
        dimension_numbers=(((1,), (1,)), ((0,), (0,))),
        preferred_element_type=jnp.float32)                          # [TB, NH, D] f32

    # Head-max + single full-tile lane-dense store (no per-row masked stores).
    o_ref[...] = jnp.max(agg, axis=1)                                # [TB, D]


# ---------------------------------------------------------------------------
# Generation-aware tiling helpers
# ---------------------------------------------------------------------------

def _pad(x, m):
    return -(-x // m) * m


def _scoped_vmem_limit():
    """Scoped VMEM budget: ~75% of physical, capped at 100 MiB."""
    phys = 128 * 1024 * 1024
    try:
        info = pltpu.get_tpu_info()
        phys = int(getattr(info, "vmem_capacity_bytes", phys))
    except Exception:
        pass
    return min(int(phys * 3 // 4), 100 * 1024 * 1024)


def _step_vmem_bytes(tb, S, D, Hh, NH):
    """Padded-footprint estimate (lane dim -> 128, sublane -> 8/16)."""
    hs_blk = tb * _pad(S, 16) * _pad(D, 128) * 2          # bf16 hidden_states tile
    bias_blk = tb * _pad(S, 8) * 128 * 4                  # f32, last dim 1 padded to 128 lanes
    out_blk = _pad(tb, 8) * _pad(D, 128) * 4              # f32 output tile
    weights = (_pad(D, 16) * _pad(Hh, 128) * 2
               + _pad(Hh, 16) * _pad(NH, 128) * 2)        # bf16 weights (resident)
    # Streamed blocks double-buffered; weights counted x2 to stay conservative.
    return 2 * (hs_blk + bias_blk + out_blk) + 2 * weights


def _pick_tb(B, S, D, Hh, NH, vmem_limit, requested=None):
    # Output block is (tb, D): its sublane dim is tb, so keep tb a multiple of
    # 8 (or the full batch) to satisfy the (8, 128) BlockSpec constraint.
    candidates = [t for t in range(1, B + 1)
                  if B % t == 0 and (t % 8 == 0 or t == B)]
    if requested is not None:
        candidates = [t for t in candidates if t <= requested] or candidates[:1]
    budget = vmem_limit // 2      # headroom for intermediates / compiler scratch
    fitting = [t for t in candidates if _step_vmem_bytes(t, S, D, Hh, NH) <= budget]
    if not fitting:
        fitting = [min(candidates)]
    # Prefer >= 4 grid steps (>= 2 per v7x TensorCore) so the pipeline overlaps.
    preferred = [t for t in fitting if B // t >= 4]
    pool = preferred if preferred else fitting
    return max(pool)


# ---------------------------------------------------------------------------
# Wrapper
# ---------------------------------------------------------------------------

def aggregator_max(hidden_states, attention_mask, w1, w2, *, tb=None):
    """hidden_states: [B, S, D] f32 (cast to bf16 internally),
    attention_mask: [B, S], w1: [D, Hh], w2: [Hh, NH]. Returns [B, D] f32."""
    B, S, D = hidden_states.shape
    Dw, Hh = w1.shape
    NH = w2.shape[1]
    assert Dw == D
    # Keep the flattened-scorer reshape a free relayout (no tile crossing).
    assert S % 8 == 0, "pad seq_len to a multiple of 8"

    vmem_limit = _scoped_vmem_limit()
    tb = _pick_tb(B, S, D, Hh, NH, vmem_limit, requested=tb)
    assert B % tb == 0

    # Additive mask bias [B, S, 1]: seq on the sublane axis so the broadcast
    # over NH lanes inside the kernel is free.
    bias = (-10000.0 * (1.0 - attention_mask.astype(jnp.float32)))[..., None]

    # bf16 streams: halves hs HBM traffic; matmuls accumulate in f32.
    hs_bf = hidden_states.astype(jnp.bfloat16)
    w1_bf = w1.astype(jnp.bfloat16)
    w2_bf = w2.astype(jnp.bfloat16)

    out = pl.pallas_call(
        aggregator_max_kernel,
        out_shape=jax.ShapeDtypeStruct((B, D), jnp.float32),
        grid_spec=pltpu.PrefetchScalarGridSpec(
            num_scalar_prefetch=0,
            grid=(B // tb,),
            in_specs=[
                pl.BlockSpec((tb, S, D), lambda b: (b, 0, 0)),   # hidden_states (bf16)
                pl.BlockSpec((tb, S, 1), lambda b: (b, 0, 0)),   # additive mask bias
                pl.BlockSpec((D, Hh), lambda b: (0, 0)),         # w1 (constant index -> resident)
                pl.BlockSpec((Hh, NH), lambda b: (0, 0)),        # w2 (constant index -> resident)
            ],
            out_specs=pl.BlockSpec((tb, D), lambda b: (b, 0)),   # lane-dense 2-D output
        ),
        compiler_params=pltpu.CompilerParams(
            dimension_semantics=("parallel",),
            vmem_limit_bytes=vmem_limit,
        ),
    )(hs_bf, bias, w1_bf, w2_bf)
    return out


def aggregator_max_ref(hidden_states, attention_mask, w1, w2):
    """Pure-JAX f32 reference mirroring the PyTorch module."""
    logits = jnp.tanh(hidden_states @ w1) @ w2                       # [B, S, NH]
    logits = logits - 10000.0 * (1.0 - attention_mask)[:, :, None]
    attn = jax.nn.softmax(logits, axis=1)                            # [B, S, NH]
    agg = jnp.einsum("bsh,bsd->bhd", attn, hidden_states)            # [B, NH, D]
    return jnp.max(agg, axis=1)                                      # [B, D]


if __name__ == "__main__":
    # Small shapes consistent with the module (num_heads default = 16).
    # B=32 so the chosen tb=8 gives grid=(4,): >= 2 pipelined steps per v7x core.
    B, S, D = 32, 8, 32          # batch, seq_len, input_size
    Hh, NH = 64, 16              # hidden_size, num_heads

    key = jax.random.PRNGKey(0)
    k_hs, k_w1, k_w2, k_len = jax.random.split(key, 4)

    hidden_states = jax.random.normal(k_hs, (B, S, D), dtype=jnp.float32)
    # Variable-length prefix masks.
    lengths = jax.random.randint(k_len, (B,), 1, S + 1)
    attention_mask = (jnp.arange(S)[None, :] < lengths[:, None]).astype(jnp.float32)

    # PyTorch Linear stores [out, in]; we keep the transposed [in, out] form.
    w1 = jax.random.normal(k_w1, (D, Hh), dtype=jnp.float32) * 0.05
    w2 = jax.random.normal(k_w2, (Hh, NH), dtype=jnp.float32) * 0.05

    out = aggregator_max(hidden_states, attention_mask, w1, w2)
    out = jax.block_until_ready(out)

    ref = aggregator_max_ref(hidden_states, attention_mask, w1, w2)
    assert out.shape == (B, D)
    # Tolerance relaxed vs. the f32 reference because hidden_states/weights are
    # bf16 on the MXU (f32 accumulation); observed error is ~1e-3 relative.
    assert jnp.allclose(out, ref, atol=2e-2, rtol=2e-2), "mismatch vs reference"

    print("KERNEL_OK")
</pallas_src>

<mosaic_0001>
module attributes {stable_mosaic.version = 11 : i64} {
  func.func @aggregator_max_kernel(%arg0: i32, %arg1: memref<8x8x32xbf16, #tpu.memory_space<vmem>>, %arg2: memref<8x8x1xf32, #tpu.memory_space<vmem>>, %arg3: memref<32x64xbf16, #tpu.memory_space<vmem>>, %arg4: memref<64x16xbf16, #tpu.memory_space<vmem>>, %arg5: memref<8x32xf32, #tpu.memory_space<vmem>>) attributes {dimension_semantics = [#tpu.dimension_semantics<parallel>], iteration_bounds = array<i64: 4>, scalar_prefetch = 0 : i64, scratch_operands = 0 : i64, tpu.core_type = #tpu.core_type<tc>, window_params = [{transform_indices = @transform_0, window_bounds = array<i64: 8, 8, 32>}, {transform_indices = @transform_1, window_bounds = array<i64: 8, 8, 1>}, {pipeline_mode = #tpu.pipeline_mode<synchronous>, transform_indices = @transform_2, window_bounds = array<i64: 32, 64>}, {pipeline_mode = #tpu.pipeline_mode<synchronous>, transform_indices = @transform_3, window_bounds = array<i64: 64, 16>}, {transform_indices = @transform_4, window_bounds = array<i64: 8, 32>}]} {
    %c0 = arith.constant 0 : index
    %c0_0 = arith.constant 0 : index
    %c0_1 = arith.constant 0 : index
    %0 = vector.load %arg1[%c0, %c0_0, %c0_1] : memref<8x8x32xbf16, #tpu.memory_space<vmem>>, vector<8x8x32xbf16>
    %1 = vector.shape_cast %0 : vector<8x8x32xbf16> to vector<64x32xbf16>
    %c0_2 = arith.constant 0 : index
    %c0_3 = arith.constant 0 : index
    %2 = vector.load %arg3[%c0_2, %c0_3] : memref<32x64xbf16, #tpu.memory_space<vmem>>, vector<32x64xbf16>
    %cst = arith.constant dense<0.000000e+00> : vector<64x64xf32>
    %3 = tpu.matmul %1, %2, %cst {dimension_numbers = #tpu.dot_dimension_numbers<[1], [0], [0], [1], [0, 0, 1, 1], [], []>} : vector<64x32xbf16>, vector<32x64xbf16>, vector<64x64xf32> -> vector<64x64xf32>
    %4 = math.tanh %3 : vector<64x64xf32>
    %5 = arith.truncf %4 : vector<64x64xf32> to vector<64x64xbf16>
    %c0_4 = arith.constant 0 : index
    %c0_5 = arith.constant 0 : index
    %6 = vector.load %arg4[%c0_4, %c0_5] : memref<64x16xbf16, #tpu.memory_space<vmem>>, vector<64x16xbf16>
    %cst_6 = arith.constant dense<0.000000e+00> : vector<64x16xf32>
    %7 = tpu.matmul %5, %6, %cst_6 {dimension_numbers = #tpu.dot_dimension_numbers<[1], [0], [0], [1], [0, 0, 1, 1], [], []>} : vector<64x64xbf16>, vector<64x16xbf16>, vector<64x16xf32> -> vector<64x16xf32>
    %8 = vector.shape_cast %7 : vector<64x16xf32> to vector<8x8x16xf32>
    %c0_7 = arith.constant 0 : index
    %c0_8 = arith.constant 0 : index
    %c0_9 = arith.constant 0 : index
    %9 = vector.load %arg2[%c0_7, %c0_8, %c0_9] : memref<8x8x1xf32, #tpu.memory_space<vmem>>, vector<8x8x1xf32>
    %10 = vector.broadcast %9 : vector<8x8x1xf32> to vector<8x8x16xf32>
    %11 = arith.addf %8, %10 : vector<8x8x16xf32>
    %cst_10 = arith.constant dense<0xFF800000> : vector<8x16xf32>
    %12 = vector.multi_reduction <maximumf>, %11, %cst_10 [1] : vector<8x8x16xf32> to vector<8x16xf32>
    %13 = vector.shape_cast %12 : vector<8x16xf32> to vector<8x1x16xf32>
    %14 = vector.broadcast %13 : vector<8x1x16xf32> to vector<8x8x16xf32>
    %15 = arith.subf %11, %14 : vector<8x8x16xf32>
    %16 = math.exp %15 : vector<8x8x16xf32>
    %cst_11 = arith.constant dense<0.000000e+00> : vector<8x16xf32>
    %17 = vector.multi_reduction <add>, %16, %cst_11 [1] : vector<8x8x16xf32> to vector<8x16xf32>
    %18 = vector.shape_cast %17 : vector<8x16xf32> to vector<8x1x16xf32>
    %19 = tpu.reciprocal %18 {approx = true} : vector<8x1x16xf32> -> vector<8x1x16xf32>
    %20 = vector.broadcast %19 : vector<8x1x16xf32> to vector<8x8x16xf32>
    %21 = arith.mulf %16, %20 : vector<8x8x16xf32>
    %22 = arith.truncf %21 : vector<8x8x16xf32> to vector<8x8x16xbf16>
    %cst_12 = arith.constant dense<0.000000e+00> : vector<8x16x32xf32>
    %23 = tpu.matmul %22, %0, %cst_12 {dimension_numbers = #tpu.dot_dimension_numbers<[1], [1], [2], [2], [0, 0, 0, 2, 1, 2], [0], [0]>} : vector<8x8x16xbf16>, vector<8x8x32xbf16>, vector<8x16x32xf32> -> vector<8x16x32xf32>
    %cst_13 = arith.constant dense<0xFF800000> : vector<8x32xf32>
    %24 = vector.multi_reduction <maximumf>, %23, %cst_13 [1] : vector<8x16x32xf32> to vector<8x32xf32>
    %c0_14 = arith.constant 0 : index
    %c0_15 = arith.constant 0 : index
    %25 = vector.load %arg5[%c0_14, %c0_15] : memref<8x32xf32, #tpu.memory_space<vmem>>, vector<8x32xf32>
    tpu.vector_store %arg5[%c0_14, %c0_15], %24 {strides = array<i32>} : memref<8x32xf32, #tpu.memory_space<vmem>>, vector<8x32xf32>,
    return
  }
  func.func @transform_0(%arg0: i32) -> (i32, i32, i32) {
    %c0_i32 = arith.constant 0 : i32
    %c0_i32_0 = arith.constant 0 : i32
    %c0_i32_1 = arith.constant 0 : i32
    return %arg0, %c0_i32, %c0_i32_0 : i32, i32, i32
  }
  func.func @transform_1(%arg0: i32) -> (i32, i32, i32) {
    %c0_i32 = arith.constant 0 : i32
    %c0_i32_0 = arith.constant 0 : i32
    %c0_i32_1 = arith.constant 0 : i32
    return %arg0, %c0_i32, %c0_i32_0 : i32, i32, i32
  }
  func.func @transform_2(%arg0: i32) -> (i32, i32) {
    %c0_i32 = arith.constant 0 : i32
    %c0_i32_0 = arith.constant 0 : i32
    %c0_i32_1 = arith.constant 0 : i32
    return %c0_i32, %c0_i32_0 : i32, i32
  }
  func.func @transform_3(%arg0: i32) -> (i32, i32) {
    %c0_i32 = arith.constant 0 : i32
    %c0_i32_0 = arith.constant 0 : i32
    %c0_i32_1 = arith.constant 0 : i32
    return %c0_i32, %c0_i32_0 : i32, i32
  }
  func.func @transform_4(%arg0: i32) -> (i32, i32) {
    %c0_i32 = arith.constant 0 : i32
    %c0_i32_0 = arith.constant 0 : i32
    return %arg0, %c0_i32 : i32, i32
  }
}

</mosaic_0001>

<llo_original>
// kernel: tpu_custom_call.1
$region0: #{tpu_custom_call.1}
  #allocation0 [shape = 'u32[]', space=smem, size = 0x4, offset = 0x4, fixed_abs, tag = 'smem constant byte address 0x4 - core index']
  #allocation1 [shape = 'u32[144,128]{1,0:T(1,128)}', space=vmem, size = 0x12000, scoped, tag = 'internal scratch']
  %s0 = inlined_call_operand.hbm [shape: bf16[32,8,32], index: 0, kind: input, shape index: {}]
  %s1 = inlined_call_operand.hbm [shape: f32[32,8,1], index: 1, kind: input, shape index: {}]
  %s2 = inlined_call_operand.hbm [shape: bf16[32,64], index: 2, kind: input, shape index: {}]
  %s3 = inlined_call_operand.hbm [shape: bf16[64,16], index: 3, kind: input, shape index: {}]
  %s4 = inlined_call_operand.hbm [shape: f32[32,32], index: 4, kind: output, shape index: {}]
  %s5 = sld [smem:[#allocation0]]
  $region65: #{tpu_custom_call.1} parent=0
    _
  %s7 = ssub.s32 1, %s5
  %s8 = scalar_select 0, %s7, %s5
  $region1: #{tpu_custom_call.1} parent=0
    #allocation2 [shape = 'u8[32768]{0}', space=vmem, size = 0x8000, scoped, tag = 'input window, operand 0']
    #allocation3 [shape = 's32[2]{0}', space=sflag, size = 0x8, scoped, tag = 'scoped memory for tpu_custom_call.1']
    #allocation4 [shape = 's32[2]{0}', space=sflag, size = 0x8, scoped, tag = 'scoped memory for tpu_custom_call.1']
    #allocation5 [shape = 'u8[65536]{0}', space=vmem, size = 0x10000, scoped, tag = 'input window, operand 1']
    #allocation6 [shape = 's32[2]{0}', space=sflag, size = 0x8, scoped, tag = 'scoped memory for tpu_custom_call.1']
    #allocation7 [shape = 'u8[8192]{0}', space=vmem, size = 0x2000, scoped, tag = 'input window, operand 2, single buffered']
    #allocation8 [shape = 'u8[16384]{0}', space=vmem, size = 0x4000, scoped, tag = 'input window, operand 3, single buffered']
    #allocation9 [shape = 's32[1]{0}', space=sflag, size = 0x4, scoped, tag = 'scoped memory for tpu_custom_call.1']
    #allocation10 [shape = 'u8[8192]{0}', space=vmem, size = 0x2000, scoped, tag = 'output window, operand 0']
    %9 = vsyncpa [#allocation3], 0
    %s10 = scalar_lea.sflag [#allocation3], 1
    %11 = vsyncpa %s10, 0
    %12 = vsyncpa [#allocation6], 0
    %s13 = scalar_lea.sflag [#allocation6], 1
    %14 = vsyncpa %s13, 0
    %15 = vsyncpa [#allocation9], 0
    %16 = vsyncpa [#allocation4], 0
    %s17 = scalar_lea.sflag [#allocation4], 1
    %18 = vsyncpa %s17, 0
    loop: start=0, step=1, limit=6
    $region2: #{tpu_custom_call.1} parent=1 // loop_pre_header
      _
    $region3: #{tpu_custom_call.1} parent=1 // loop_header
      %s20 = sphi 0, %s24
      %p21 = scmp.ge.s32.totalorder %s20, 6
      %s30 = sphi 0, %s32
      %s33 = sphi 0, %s30
      %s34 = sphi 0, %s33
      %s50 = sphi 0, %s34
      %s56 = sphi 0, %s58
      %s59 = sphi 0, %s56
      %s60 = sphi 0, %s59
      %s76 = sphi 0, %s60
      %s80 = sphi 0, %s80
      %s82 = sphi 0, %s80
      %s83 = sphi 0, %s82
      %s97 = sphi 0, %s83
      %s101 = sphi 0, %s101
      %s103 = sphi 0, %s101
      %s104 = sphi 0, %s103
      %s118 = sphi 0, %s104
      %s124 = sphi 0, %s126
      %s127 = sphi 0, %s124
      %s128 = sphi 0, %s127
      %s144 = sphi 0, %s128
    $region4: #{tpu_custom_call.1} parent=1 // loop_header_branch
      %23 = sbr.rel (%p21) target = $region8
    $region5: #{tpu_custom_call.1} parent=1 // loop_body
      %s25 = ssub.s32 %s20, 1
      %s26 = ssub.s32 %s20, 2
      %s27 = sadd.s32 %s20, 1
      %s28 = ssub.s32 %s20, %s27
      %p29 = scmp.eq.s32.totalorder %s28, 0
      %s31 = sadd.s32 %s30, 1
      %s32 = scalar_select %p29, %s30, %s31
      %p35 = pneg %p29
      %p36 = scmp.eq.s32.totalorder %s20, 3
      %p37 = por %p35, %p36
      %p38 = scmp.ne.s32.totalorder %s30, %s33
      %p39 = scmp.eq.s32.totalorder %s20, 0
      %p40 = por %p38, %p39
      %p41 = scmp.ne.s32.totalorder %s30, %s33
      %p42 = scmp.eq.s32.totalorder %s25, 3
      %p43 = por %p41, %p42
      %p44 = scmp.ne.s32.totalorder %s33, %s34
      %p45 = scmp.eq.s32.totalorder %s25, 0
      %p46 = por %p44, %p45
      %p47 = scmp.ne.s32.totalorder %s33, %s34
      %p48 = scmp.eq.s32.totalorder %s26, 3
      %p49 = por %p47, %p48
      %p51 = scmp.ne.s32.totalorder %s34, %s50
      %p52 = scmp.eq.s32.totalorder %s26, 0
      %p53 = por %p51, %p52
      %s54 = ssub.s32 %s20, %s27
      %p55 = scmp.eq.s32.totalorder %s54, 0
      %s57 = sadd.s32 %s56, 1
      %s58 = scalar_select %p55, %s56, %s57
      %p61 = pneg %p55
      %p62 = scmp.eq.s32.totalorder %s20, 3
      %p63 = por %p61, %p62
      %p64 = scmp.ne.s32.totalorder %s56, %s59
      %p65 = scmp.eq.s32.totalorder %s20, 0
      %p66 = por %p64, %p65
      %p67 = scmp.ne.s32.totalorder %s56, %s59
      %p68 = scmp.eq.s32.totalorder %s25, 3
      %p69 = por %p67, %p68
      %p70 = scmp.ne.s32.totalorder %s59, %s60
      %p71 = scmp.eq.s32.totalorder %s25, 0
      %p72 = por %p70, %p71
      %p73 = scmp.ne.s32.totalorder %s59, %s60
      %p74 = scmp.eq.s32.totalorder %s26, 3
      %p75 = por %p73, %p74
      %p77 = scmp.ne.s32.totalorder %s60, %s76
      %p78 = scmp.eq.s32.totalorder %s26, 0
      %p79 = por %p77, %p78
      %s81 = sadd.s32 %s80, 1
      %p84 = scmp.eq.s32.totalorder %s20, 3
      %p85 = scmp.ne.s32.totalorder %s80, %s82
      %p86 = scmp.eq.s32.totalorder %s20, 0
      %p87 = por %p85, %p86
      %p88 = scmp.ne.s32.totalorder %s80, %s82
      %p89 = scmp.eq.s32.totalorder %s25, 3
      %p90 = por %p88, %p89
      %p91 = scmp.ne.s32.totalorder %s82, %s83
      %p92 = scmp.eq.s32.totalorder %s25, 0
      %p93 = por %p91, %p92
      %p94 = scmp.ne.s32.totalorder %s82, %s83
      %p95 = scmp.eq.s32.totalorder %s26, 3
      %p96 = por %p94, %p95
      %p98 = scmp.ne.s32.totalorder %s83, %s97
      %p99 = scmp.eq.s32.totalorder %s26, 0
      %p100 = por %p98, %p99
      %s102 = sadd.s32 %s101, 1
      %p105 = scmp.eq.s32.totalorder %s20, 3
      %p106 = scmp.ne.s32.totalorder %s101, %s103
      %p107 = scmp.eq.s32.totalorder %s20, 0
      %p108 = por %p106, %p107
      %p109 = scmp.ne.s32.totalorder %s101, %s103
      %p110 = scmp.eq.s32.totalorder %s25, 3
      %p111 = por %p109, %p110
      %p112 = scmp.ne.s32.totalorder %s103, %s104
      %p113 = scmp.eq.s32.totalorder %s25, 0
      %p114 = por %p112, %p113
      %p115 = scmp.ne.s32.totalorder %s103, %s104
      %p116 = scmp.eq.s32.totalorder %s26, 3
      %p117 = por %p115, %p116
      %p119 = scmp.ne.s32.totalorder %s104, %s118
      %p120 = scmp.eq.s32.totalorder %s26, 0
      %p121 = por %p119, %p120
      %s122 = ssub.s32 %s20, %s27
      %p123 = scmp.eq.s32.totalorder %s122, 0
      %s125 = sadd.s32 %s124, 1
      %s126 = scalar_select %p123, %s124, %s125
      %p129 = pneg %p123
      %p130 = scmp.eq.s32.totalorder %s20, 3
      %p131 = por %p129, %p130
      %p132 = scmp.ne.s32.totalorder %s124, %s127
      %p133 = scmp.eq.s32.totalorder %s20, 0
      %p134 = por %p132, %p133
      %p135 = scmp.ne.s32.totalorder %s124, %s127
      %p136 = scmp.eq.s32.totalorder %s25, 3
      %p137 = por %p135, %p136
      %p138 = scmp.ne.s32.totalorder %s127, %s128
      %p139 = scmp.eq.s32.totalorder %s25, 0
      %p140 = por %p138, %p139
      %p141 = scmp.ne.s32.totalorder %s127, %s128
      %p142 = scmp.eq.s32.totalorder %s26, 3
      %p143 = por %p141, %p142
      %p145 = scmp.ne.s32.totalorder %s128, %s144
      %p146 = scmp.eq.s32.totalorder %s26, 0
      %p147 = por %p145, %p146
      %p148 = scmp.le.s32.totalorder 1, %s20
      %p149 = scmp.lt.s32.totalorder %s20, 5
      %p150 = pnand %p148, %p149
      %p151 = pneg %p150
      // Predicated region
      $region9: #{tpu_custom_call.1} parent=5 // pred_check
        _
      $region10: #{tpu_custom_call.1} parent=5 // pred_check_branch
        %153 = sbr.rel (%p150) target = $region12
      $region11: #{tpu_custom_call.1} parent=5 // pred_region
        %s154 = ssub.s32 %s20, 1
        // Predicated region
        $region13: #{tpu_custom_call.1} parent=11 // pred_check
          %p155 = pneg %p93
        $region14: #{tpu_custom_call.1} parent=11 // pred_check_branch
          %157 = sbr.rel (%p155) target = $region16
        $region15: #{tpu_custom_call.1} parent=11 // pred_region
          %s159 = ssub.s32 256, 256
          %160 = vsyncadd [#allocation6], %s159
          %s161 = sshll.u32 [#allocation7], 4
          %s162 = int_to_ptr.vmem [resolvable:$true] %s161
          %167 = dma.hbm_to_vmem [thread:$0]  %s2, 256, %s162, [#allocation6], 64, 64, 4
        $region16: #{tpu_custom_call.1} parent=11 // pred_fallthru
          _
        // Predicated region
        $region17: #{tpu_custom_call.1} parent=11 // pred_check
          %p168 = pneg %p114
        $region18: #{tpu_custom_call.1} parent=11 // pred_check_branch
          %170 = sbr.rel (%p168) target = $region20
        $region19: #{tpu_custom_call.1} parent=11 // pred_region
          %s172 = ssub.s32 512, 512
          %173 = vsyncadd [#allocation9], %s172
          %s174 = sshll.u32 [#allocation8], 4
          %s175 = int_to_ptr.vmem [resolvable:$true] %s174
          %180 = dma.hbm_to_vmem [thread:$0]  %s3, 512, %s175, [#allocation9], 64, 64, 4
        $region20: #{tpu_custom_call.1} parent=11 // pred_fallthru
          _
      $region12: #{tpu_custom_call.1} parent=5 // pred_fallthru
        _
      %p181 = scmp.lt.s32.totalorder %s20, 4
      // Predicated region
      $region21: #{tpu_custom_call.1} parent=5 // pred_check
        %p182 = pneg %p181
      $region22: #{tpu_custom_call.1} parent=5 // pred_check_branch
        %184 = sbr.rel (%p182) target = $region24
      $region23: #{tpu_custom_call.1} parent=5 // pred_region
        // Predicated region
        $region25: #{tpu_custom_call.1} parent=23 // pred_check
          %p185 = pneg %p40
        $region26: #{tpu_custom_call.1} parent=23 // pred_check_branch
          %187 = sbr.rel (%p185) target = $region28
        $region27: #{tpu_custom_call.1} parent=23 // pred_region
          %s188 = sand.u32 %s30, 1
          %s189 = scalar_lea.sflag [#allocation3], %s188
          %s190 = sand.u32 %s30, 1
          %s191 = smul.addr %s190, 32
          %s192 = scalar_lea.vmem [#allocation2], %s191
          %s193 = smul.u32 8, %s20
          %s195 = ssub.s32 512, 512
          %196 = vsyncadd %s189, %s195
          %s197 = smul.addr %s193, 64
          %s198 = scalar_lea.hbm %s0, %s197
          %s199 = sshll.u32 %s192, 4
          %s200 = int_to_ptr.vmem [resolvable:$true] %s199
          %205 = dma.hbm_to_vmem [thread:$0]  %s198, 512, %s200, %s189, 64, 64, 4
        $region28: #{tpu_custom_call.1} parent=23 // pred_fallthru
          _
        // Predicated region
        $region29: #{tpu_custom_call.1} parent=23 // pred_check
          %p206 = pneg %p66
        $region30: #{tpu_custom_call.1} parent=23 // pred_check_branch
          %208 = sbr.rel (%p206) target = $region32
        $region31: #{tpu_custom_call.1} parent=23 // pred_region
          %s209 = sand.u32 %s20, 1
          %s210 = scalar_lea.sflag [#allocation6], %s209
          %s211 = sand.u32 %s56, 1
          %s212 = smul.addr %s211, 64
          %s213 = scalar_lea.vmem [#allocation5], %s212
          %s214 = smul.u32 8, %s20
          %s216 = ssub.s32 1024, 1024
          %217 = vsyncadd %s210, %s216
          %s218 = smul.addr %s214, 128
          %s219 = scalar_lea.hbm %s1, %s218
          %s220 = sshll.u32 %s213, 4
          %s221 = int_to_ptr.vmem [resolvable:$true] %s220
          %226 = dma.hbm_to_vmem [thread:$0]  %s219, 1024, %s221, %s210, 128, 128, 8
        $region32: #{tpu_custom_call.1} parent=23 // pred_fallthru
          _
      $region24: #{tpu_custom_call.1} parent=5 // pred_fallthru
        _
      %p227 = scmp.le.s32.totalorder 1, %s20
      %p228 = scmp.lt.s32.totalorder %s20, 5
      %p229 = pnand %p227, %p228
      %p230 = pneg %p229
      // Predicated region
      $region33: #{tpu_custom_call.1} parent=5 // pred_check
        _
      $region34: #{tpu_custom_call.1} parent=5 // pred_check_branch
        %232 = sbr.rel (%p229) target = $region36
      $region35: #{tpu_custom_call.1} parent=5 // pred_region
        %s233 = ssub.s32 %s20, 1
        %s234 = sand.u32 %s33, 1
        %s235 = scalar_lea.sflag [#allocation3], %s234
        %s236 = sand.u32 %s33, 1
        %s237 = smul.addr %s236, 32
        %s238 = scalar_lea.vmem [#allocation2], %s237
        // Predicated region
        $region37: #{tpu_custom_call.1} parent=35 // pred_check
          %p239 = pneg %p46
        $region38: #{tpu_custom_call.1} parent=35 // pred_check_branch
          %241 = sbr.rel (%p239) target = $region40
        $region39: #{tpu_custom_call.1} parent=35 // pred_region
          %242 = dma.done %s235, 512
        $region40: #{tpu_custom_call.1} parent=35 // pred_fallthru
          _
        %s243 = sand.u32 %s25, 1
        %s244 = scalar_lea.sflag [#allocation6], %s243
        %s245 = sand.u32 %s59, 1
        %s246 = smul.addr %s245, 64
        %s247 = scalar_lea.vmem [#allocation5], %s246
        // Predicated region
        $region41: #{tpu_custom_call.1} parent=35 // pred_check
          %p248 = pneg %p72
        $region42: #{tpu_custom_call.1} parent=35 // pred_check_branch
          %250 = sbr.rel (%p248) target = $region44
        $region43: #{tpu_custom_call.1} parent=35 // pred_region
          %251 = dma.done %s244, 1024
        $region44: #{tpu_custom_call.1} parent=35 // pred_fallthru
          _
        // Predicated region
        $region45: #{tpu_custom_call.1} parent=35 // pred_check
          %p252 = pneg %p93
        $region46: #{tpu_custom_call.1} parent=35 // pred_check_branch
          %254 = sbr.rel (%p252) target = $region48
        $region47: #{tpu_custom_call.1} parent=35 // pred_region
          %255 = dma.done [#allocation6], 256
        $region48: #{tpu_custom_call.1} parent=35 // pred_fallthru
          _
        // Predicated region
        $region49: #{tpu_custom_call.1} parent=35 // pred_check
          %p256 = pneg %p114
        $region50: #{tpu_custom_call.1} parent=35 // pred_check_branch
          %258 = sbr.rel (%p256) target = $region52
        $region51: #{tpu_custom_call.1} parent=35 // pred_region
          %259 = dma.done [#allocation9], 512
        $region52: #{tpu_custom_call.1} parent=35 // pred_fallthru
          _
        %s260 = sand.u32 %s33, 1
        %s261 = scalar_lea.sflag [#allocation3], %s260
        %s262 = sand.u32 %s33, 1
        %s263 = smul.addr %s262, 32
        %s264 = scalar_lea.vmem [#allocation2], %s263
        %p265 = pneg %p46
        %p266 = pneg %p43
        %s267 = sand.u32 %s25, 1
        %s268 = scalar_lea.sflag [#allocation6], %s267
        %s269 = sand.u32 %s59, 1
        %s270 = smul.addr %s269, 64
        %s271 = scalar_lea.vmem [#allocation5], %s270
        %p272 = pneg %p72
        %p273 = pneg %p69
        %p274 = pneg %p93
        %p275 = pneg %p90
        %p276 = pneg %p114
        %p277 = pneg %p111
        %p278 = pneg %p140
        %p279 = pneg %p137
        %s280 = sand.u32 %s127, 1
        %s281 = scalar_lea.sflag [#allocation4], %s280
        %s282 = sand.u32 %s127, 1
        %s283 = smul.addr %s282, 8
        %s284 = scalar_lea.vmem [#allocation10], %s283
        %s285 = smul.u32 8, %s25
        %s286 = smul.u32 8, %s25
        %v288 = vld [vmem:[%s238] sm:$0xf]
        %v289 = vld [vmem:[%s238 + $0x4] sm:$0xf]
        %v290 = vld [vmem:[%s238 + $0x8] sm:$0xf]
        %v291 = vld [vmem:[%s238 + $0xc] sm:$0xf]
        %v292 = vld [vmem:[%s238 + $0x10] sm:$0xf]
        %v293 = vld [vmem:[%s238 + $0x14] sm:$0xf]
        %v294 = vld [vmem:[%s238 + $0x18] sm:$0xf]
        %v295 = vld [vmem:[%s238 + $0x1c] sm:$0xf]
        %v296 = vld [vmem:[#allocation7] sm:$0xf]
        %v297 = vld [vmem:[#allocation7 + $0x4] sm:$0xf]
        %v298 = vld [vmem:[#allocation7 + $0x8] sm:$0xf]
        %v299 = vld [vmem:[#allocation7 + $0xc] sm:$0xf]
        %v308 = vunpack.c.l.b16 %v288
        %v309 = vunpack.c.l.b16 %v289
        %v310 = vunpack.c.l.b16 %v290
        %v311 = vunpack.c.l.b16 %v291
        %v312 = vunpack.c.l.b16 %v292
        %v313 = vunpack.c.l.b16 %v293
        %v314 = vunpack.c.l.b16 %v294
        %v315 = vunpack.c.l.b16 %v295
        %v316 = vpack.c.b16 %v309, %v308
        %v317 = vpack.c.b16 %v311, %v310
        %v318 = vpack.c.b16 %v313, %v312
        %v319 = vpack.c.b16 %v315, %v314
        %v324 = vunpack.c.l.b16 %v296
        %v325 = vunpack.c.l.b16 %v297
        %v326 = vunpack.c.l.b16 %v298
        %v327 = vunpack.c.l.b16 %v299
        %v328 = vpack.c.b16 %v325, %v324
        %v329 = vpack.c.b16 %v327, %v326
        %vm332 = vcmask 261120
        %v334 = vsel %vm332, %v316, 0
        %v337 = vsel %vm332, %v317, 0
        %v340 = vsel %vm332, %v318, 0
        %v343 = vsel %vm332, %v319, 0
        %345 = vmatprep.subr.bf16.mxu0 0
        %346 = vmatpush1.bf16.msra.mxu0 %v328
        %347 = vmatprep.subr.bf16.mxu0 0
        %348 = vmatpush1.bf16.msra.mxu0 %v329
        %349 = vmatprep.subr.bf16.mxu0 0
        %350 = vmatpush1.bf16.msra.mxu0 0
        %351 = vmatprep.subr.bf16.mxu0 0
        %352 = vmatpush1.bf16.msra.mxu0 0
        %353 = vmatprep.subr.bf16.mxu0 0
        %354 = vmatpush1.bf16.msra.mxu0 0
        %355 = vmatprep.subr.bf16.mxu0 0
        %356 = vmatpush1.bf16.msra.mxu0 0
        %357 = vmatprep.subr.bf16.mxu0 0
        %358 = vmatpush1.bf16.msra.mxu0 0
        %359 = vmatprep.subr.bf16.mxu0 0
        %360 = vmatpush1.bf16.msra.mxu0 0
        %361 = vmatprep.subr.bf16.mxu0 0
        %362 = vmatpush1.bf16.msra.mxu0 0
        %363 = vmatprep.subr.bf16.mxu0 0
        %364 = vmatpush1.bf16.msra.mxu0 0
        %365 = vmatprep.subr.bf16.mxu0 0
        %366 = vmatpush1.bf16.msra.mxu0 0
        %367 = vmatprep.subr.bf16.mxu0 0
        %368 = vmatpush1.bf16.msra.mxu0 0
        %369 = vmatprep.subr.bf16.mxu0 0
        %370 = vmatpush1.bf16.msra.mxu0 0
        %371 = vmatprep.subr.bf16.mxu0 0
        %372 = vmatpush1.bf16.msra.mxu0 0
        %373 = vmatprep.subr.bf16.mxu0 0
        %374 = vmatpush1.bf16.msra.mxu0 0
        %375 = vmatprep.subr.bf16.mxu0 0
        %376 = vmatpush1.bf16.msra.mxu0 0
        %377 = vmatprep.mubr.bf16.mxu0 0
        %378 = vmatmul.mubr.bf16.gmra.mrb[0].mxu0 %v334
        %v379 = vpop.f32.mrb[0].mxu0
        %v380 = vadd.f32 0.0, %v379
        %v381 = vpop.f32.mrb[0].mxu0
        %v382 = vpop.f32.mrb[0].mxu0
        %v383 = vadd.f32 0.0, %v382
        %v384 = vpop.f32.mrb[0].mxu0
        %385 = vmatprep.mubr.bf16.mxu0 0
        %386 = vmatmul.mubr.bf16.gmra.mrb[0].mxu0 %v337
        %v387 = vpop.f32.mrb[0].mxu0
        %v388 = vadd.f32 0.0, %v387
        %v389 = vpop.f32.mrb[0].mxu0
        %v390 = vpop.f32.mrb[0].mxu0
        %v391 = vadd.f32 0.0, %v390
        %v392 = vpop.f32.mrb[0].mxu0
        %393 = vmatprep.mubr.bf16.mxu0 0
        %394 = vmatmul.mubr.bf16.gmra.mrb[0].mxu0 %v340
        %v395 = vpop.f32.mrb[0].mxu0
        %v396 = vadd.f32 0.0, %v395
        %v397 = vpop.f32.mrb[0].mxu0
        %v398 = vpop.f32.mrb[0].mxu0
        %v399 = vadd.f32 0.0, %v398
        %v400 = vpop.f32.mrb[0].mxu0
        %401 = vmatprep.mubr.bf16.mxu0 0
        %402 = vmatmul.mubr.bf16.gmra.mrb[0].mxu0 %v343
        %v403 = vpop.f32.mrb[0].mxu0
        %v404 = vadd.f32 0.0, %v403
        %v405 = vpop.f32.mrb[0].mxu0
        %v406 = vpop.f32.mrb[0].mxu0
        %v407 = vadd.f32 0.0, %v406
        %v408 = vpop.f32.mrb[0].mxu0
        %409 = vdwg.mxu0
        %v410 = vtanh.pop %v380
        %v411 = vtanh.pop %v383
        %v412 = vtanh.pop %v388
        %v413 = vtanh.pop %v391
        %v414 = vtanh.pop %v396
        %v415 = vtanh.pop %v399
        %v416 = vtanh.pop %v404
        %v417 = vtanh.pop %v407
        %v418 = vpack.c.bf16 %v411, %v410
        %v419 = vpack.c.bf16 %v413, %v412
        %v420 = vpack.c.bf16 %v415, %v414
        %v421 = vpack.c.bf16 %v417, %v416
        %v422 = vld [vmem:[#allocation8] sm:$0xf]
        %v423 = vld [vmem:[#allocation8 + $0x4] sm:$0xf]
        %v424 = vld [vmem:[#allocation8 + $0x8] sm:$0xf]
        %v425 = vld [vmem:[#allocation8 + $0xc] sm:$0xf]
        %v426 = vld [vmem:[#allocation8 + $0x10] sm:$0xf]
        %v427 = vld [vmem:[#allocation8 + $0x14] sm:$0xf]
        %v428 = vld [vmem:[#allocation8 + $0x18] sm:$0xf]
        %v429 = vld [vmem:[#allocation8 + $0x1c] sm:$0xf]
        %v438 = vunpack.c.l.b16 %v422
        %v439 = vunpack.c.l.b16 %v423
        %v440 = vunpack.c.l.b16 %v424
        %v441 = vunpack.c.l.b16 %v425
        %v442 = vunpack.c.l.b16 %v426
        %v443 = vunpack.c.l.b16 %v427
        %v444 = vunpack.c.l.b16 %v428
        %v445 = vunpack.c.l.b16 %v429
        %v446 = vpack.c.b16 %v439, %v438
        %v447 = vpack.c.b16 %v441, %v440
        %v448 = vpack.c.b16 %v443, %v442
        %v449 = vpack.c.b16 %v445, %v444
        %vm454 = vcmask 523264
        %v456 = vsel %vm454, %v418, 0
        %v459 = vsel %vm454, %v419, 0
        %v462 = vsel %vm454, %v420, 0
        %v465 = vsel %vm454, %v421, 0
        %467 = vmatprep.subr.bf16.mxu0 0
        %468 = vmatpush1.bf16.msra.mxu0 %v446
        %469 = vmatprep.subr.bf16.mxu0 0
        %470 = vmatpush1.bf16.msra.mxu0 %v447
        %471 = vmatprep.subr.bf16.mxu0 0
        %472 = vmatpush1.bf16.msra.mxu0 %v448
        %473 = vmatprep.subr.bf16.mxu0 0
        %474 = vmatpush1.bf16.msra.mxu0 %v449
        %475 = vmatprep.subr.bf16.mxu0 0
        %476 = vmatpush1.bf16.msra.mxu0 0
        %477 = vmatprep.subr.bf16.mxu0 0
        %478 = vmatpush1.bf16.msra.mxu0 0
        %479 = vmatprep.subr.bf16.mxu0 0
        %480 = vmatpush1.bf16.msra.mxu0 0
        %481 = vmatprep.subr.bf16.mxu0 0
        %482 = vmatpush1.bf16.msra.mxu0 0
        %483 = vmatprep.subr.bf16.mxu0 0
        %484 = vmatpush1.bf16.msra.mxu0 0
        %485 = vmatprep.subr.bf16.mxu0 0
        %486 = vmatpush1.bf16.msra.mxu0 0
        %487 = vmatprep.subr.bf16.mxu0 0
        %488 = vmatpush1.bf16.msra.mxu0 0
        %489 = vmatprep.subr.bf16.mxu0 0
        %490 = vmatpush1.bf16.msra.mxu0 0
        %491 = vmatprep.subr.bf16.mxu0 0
        %492 = vmatpush1.bf16.msra.mxu0 0
        %493 = vmatprep.subr.bf16.mxu0 0
        %494 = vmatpush1.bf16.msra.mxu0 0
        %495 = vmatprep.subr.bf16.mxu0 0
        %496 = vmatpush1.bf16.msra.mxu0 0
        %497 = vmatprep.subr.bf16.mxu0 0
        %498 = vmatpush1.bf16.msra.mxu0 0
        %499 = vmatprep.mubr.bf16.mxu0 0
        %500 = vmatmul.mubr.bf16.gmra.mrb[0].mxu0 %v456
        %v501 = vpop.f32.mrb[0].mxu0
        %v502 = vadd.f32 0.0, %v501
        %v503 = vpop.f32.mrb[0].mxu0
        %v504 = vpop.f32.mrb[0].mxu0
        %v505 = vadd.f32 0.0, %v504
        %v506 = vpop.f32.mrb[0].mxu0
        %507 = vmatprep.mubr.bf16.mxu0 0
        %508 = vmatmul.mubr.bf16.gmra.mrb[0].mxu0 %v459
        %v509 = vpop.f32.mrb[0].mxu0
        %v510 = vadd.f32 0.0, %v509
        %v511 = vpop.f32.mrb[0].mxu0
        %v512 = vpop.f32.mrb[0].mxu0
        %v513 = vadd.f32 0.0, %v512
        %v514 = vpop.f32.mrb[0].mxu0
        %515 = vmatprep.mubr.bf16.mxu0 0
        %516 = vmatmul.mubr.bf16.gmra.mrb[0].mxu0 %v462
        %v517 = vpop.f32.mrb[0].mxu0
        %v518 = vadd.f32 0.0, %v517
        %v519 = vpop.f32.mrb[0].mxu0
        %v520 = vpop.f32.mrb[0].mxu0
        %v521 = vadd.f32 0.0, %v520
        %v522 = vpop.f32.mrb[0].mxu0
        %523 = vmatprep.mubr.bf16.mxu0 0
        %524 = vmatmul.mubr.bf16.gmra.mrb[0].mxu0 %v465
        %v525 = vpop.f32.mrb[0].mxu0
        %v526 = vadd.f32 0.0, %v525
        %v527 = vpop.f32.mrb[0].mxu0
        %v528 = vpop.f32.mrb[0].mxu0
        %v529 = vadd.f32 0.0, %v528
        %v530 = vpop.f32.mrb[0].mxu0
        %531 = vdwg.mxu0
        %v532 = vld [vmem:[%s247] sm:$0xff]
        %v533 = vld [vmem:[%s247 + $0x8] sm:$0xff]
        %v534 = vld [vmem:[%s247 + $0x10] sm:$0xff]
        %v535 = vld [vmem:[%s247 + $0x18] sm:$0xff]
        %v536 = vld [vmem:[%s247 + $0x20] sm:$0xff]
        %v537 = vld [vmem:[%s247 + $0x28] sm:$0xff]
        %v538 = vld [vmem:[%s247 + $0x30] sm:$0xff]
        %v539 = vld [vmem:[%s247 + $0x38] sm:$0xff]
        %541 = vset.pattern.permute.xlu0 0
        %542 = vperm.xlu0 %541, %v532
        %v543 = vpop.permute.xlu0 %542
        %546 = vset.pattern.permute.xlu0 0
        %547 = vperm.xlu0 %546, %v533
        %v548 = vpop.permute.xlu0 %547
        %551 = vset.pattern.permute.xlu0 0
        %552 = vperm.xlu0 %551, %v534
        %v553 = vpop.permute.xlu0 %552
        %556 = vset.pattern.permute.xlu0 0
        %557 = vperm.xlu0 %556, %v535
        %v558 = vpop.permute.xlu0 %557
        %561 = vset.pattern.permute.xlu0 0
        %562 = vperm.xlu0 %561, %v536
        %v563 = vpop.permute.xlu0 %562
        %566 = vset.pattern.permute.xlu0 0
        %567 = vperm.xlu0 %566, %v537
        %v568 = vpop.permute.xlu0 %567
        %571 = vset.pattern.permute.xlu0 0
        %572 = vperm.xlu0 %571, %v538
        %v573 = vpop.permute.xlu0 %572
        %576 = vset.pattern.permute.xlu0 0
        %577 = vperm.xlu0 %576, %v539
        %v578 = vpop.permute.xlu0 %577
        %v580 = vadd.f32 %v502, %v543
        %v581 = vadd.f32 %v505, %v548
        %v582 = vadd.f32 %v510, %v553
        %v583 = vadd.f32 %v513, %v558
        %v584 = vadd.f32 %v518, %v563
        %v585 = vadd.f32 %v521, %v568
        %v586 = vadd.f32 %v526, %v573
        %v587 = vadd.f32 %v529, %v578
        %vm588 = vcmask 130048
        %v589 = vsel %vm588, %v580, -inf
        %v590 = vrot.slane %v589, 4
        %v591 = vmax.f32 %v589, %v590
        %v592 = vrot.slane %v591, 2
        %v593 = vmax.f32 %v591, %v592
        %v594 = vrot.slane %v593, 1
        %v595 = vmax.f32 %v593, %v594
        %v596 = vsel %vm588, %v581, -inf
        %v597 = vrot.slane %v596, 4
        %v598 = vmax.f32 %v596, %v597
        %v599 = vrot.slane %v598, 2
        %v600 = vmax.f32 %v598, %v599
        %v601 = vrot.slane %v600, 1
        %v602 = vmax.f32 %v600, %v601
        %v603 = vsel %vm588, %v582, -inf
        %v604 = vrot.slane %v603, 4
        %v605 = vmax.f32 %v603, %v604
        %v606 = vrot.slane %v605, 2
        %v607 = vmax.f32 %v605, %v606
        %v608 = vrot.slane %v607, 1
        %v609 = vmax.f32 %v607, %v608
        %v610 = vsel %vm588, %v583, -inf
        %v611 = vrot.slane %v610, 4
        %v612 = vmax.f32 %v610, %v611
        %v613 = vrot.slane %v612, 2
        %v614 = vmax.f32 %v612, %v613
        %v615 = vrot.slane %v614, 1
        %v616 = vmax.f32 %v614, %v615
        %v617 = vsel %vm588, %v584, -inf
        %v618 = vrot.slane %v617, 4
        %v619 = vmax.f32 %v617, %v618
        %v620 = vrot.slane %v619, 2
        %v621 = vmax.f32 %v619, %v620
        %v622 = vrot.slane %v621, 1
        %v623 = vmax.f32 %v621, %v622
        %v624 = vsel %vm588, %v585, -inf
        %v625 = vrot.slane %v624, 4
        %v626 = vmax.f32 %v624, %v625
        %v627 = vrot.slane %v626, 2
        %v628 = vmax.f32 %v626, %v627
        %v629 = vrot.slane %v628, 1
        %v630 = vmax.f32 %v628, %v629
        %v631 = vsel %vm588, %v586, -inf
        %v632 = vrot.slane %v631, 4
        %v633 = vmax.f32 %v631, %v632
        %v634 = vrot.slane %v633, 2
        %v635 = vmax.f32 %v633, %v634
        %v636 = vrot.slane %v635, 1
        %v637 = vmax.f32 %v635, %v636
        %v638 = vsel %vm588, %v587, -inf
        %v639 = vrot.slane %v638, 4
        %v640 = vmax.f32 %v638, %v639
        %v641 = vrot.slane %v640, 2
        %v642 = vmax.f32 %v640, %v641
        %v643 = vrot.slane %v642, 1
        %v644 = vmax.f32 %v642, %v643
        %v645 = vsub.f32 %v580, %v595
        %v646 = vsub.f32 %v581, %v602
        %v647 = vsub.f32 %v582, %v609
        %v648 = vsub.f32 %v583, %v616
        %v649 = vsub.f32 %v584, %v623
        %v650 = vsub.f32 %v585, %v630
        %v651 = vsub.f32 %v586, %v637
        %v652 = vsub.f32 %v587, %v644
        %v653 = vmul.f32 %v645, 1.442695
        %v654 = vpow.pop %v653
        %v655 = vmul.f32 %v646, 1.442695
        %v656 = vpow.pop %v655
        %v657 = vmul.f32 %v647, 1.442695
        %v658 = vpow.pop %v657
        %v659 = vmul.f32 %v648, 1.442695
        %v660 = vpow.pop %v659
        %v661 = vmul.f32 %v649, 1.442695
        %v662 = vpow.pop %v661
        %v663 = vmul.f32 %v650, 1.442695
        %v664 = vpow.pop %v663
        %v665 = vmul.f32 %v651, 1.442695
        %v666 = vpow.pop %v665
        %v667 = vmul.f32 %v652, 1.442695
        %v668 = vpow.pop %v667
        %v669 = vsel %vm588, %v654, 0.0
        %v670 = vrot.slane %v669, 4
        %v671 = vadd.f32 %v669, %v670
        %v672 = vrot.slane %v671, 2
        %v673 = vadd.f32 %v671, %v672
        %v674 = vrot.slane %v673, 1
        %v675 = vadd.f32 %v673, %v674
        %v676 = vsel %vm588, %v656, 0.0
        %v677 = vrot.slane %v676, 4
        %v678 = vadd.f32 %v676, %v677
        %v679 = vrot.slane %v678, 2
        %v680 = vadd.f32 %v678, %v679
        %v681 = vrot.slane %v680, 1
        %v682 = vadd.f32 %v680, %v681
        %v683 = vsel %vm588, %v658, 0.0
        %v684 = vrot.slane %v683, 4
        %v685 = vadd.f32 %v683, %v684
        %v686 = vrot.slane %v685, 2
        %v687 = vadd.f32 %v685, %v686
        %v688 = vrot.slane %v687, 1
        %v689 = vadd.f32 %v687, %v688
        %v690 = vsel %vm588, %v660, 0.0
        %v691 = vrot.slane %v690, 4
        %v692 = vadd.f32 %v690, %v691
        %v693 = vrot.slane %v692, 2
        %v694 = vadd.f32 %v692, %v693
        %v695 = vrot.slane %v694, 1
        %v696 = vadd.f32 %v694, %v695
        %v697 = vsel %vm588, %v662, 0.0
        %v698 = vrot.slane %v697, 4
        %v699 = vadd.f32 %v697, %v698
        %v700 = vrot.slane %v699, 2
        %v701 = vadd.f32 %v699, %v700
        %v702 = vrot.slane %v701, 1
        %v703 = vadd.f32 %v701, %v702
        %v704 = vsel %vm588, %v664, 0.0
        %v705 = vrot.slane %v704, 4
        %v706 = vadd.f32 %v704, %v705
        %v707 = vrot.slane %v706, 2
        %v708 = vadd.f32 %v706, %v707
        %v709 = vrot.slane %v708, 1
        %v710 = vadd.f32 %v708, %v709
        %v711 = vsel %vm588, %v666, 0.0
        %v712 = vrot.slane %v711, 4
        %v713 = vadd.f32 %v711, %v712
        %v714 = vrot.slane %v713, 2
        %v715 = vadd.f32 %v713, %v714
        %v716 = vrot.slane %v715, 1
        %v717 = vadd.f32 %v715, %v716
        %v718 = vsel %vm588, %v668, 0.0
        %v719 = vrot.slane %v718, 4
        %v720 = vadd.f32 %v718, %v719
        %v721 = vrot.slane %v720, 2
        %v722 = vadd.f32 %v720, %v721
        %v723 = vrot.slane %v722, 1
        %v724 = vadd.f32 %v722, %v723
        %v725 = vrcp.pop %v675
        %v726 = vrcp.pop %v682
        %v727 = vrcp.pop %v689
        %v728 = vrcp.pop %v696
        %v729 = vrcp.pop %v703
        %v730 = vrcp.pop %v710
        %v731 = vrcp.pop %v717
        %v732 = vrcp.pop %v724
        %v733 = vmul.f32 %v654, %v725
        %v734 = vmul.f32 %v656, %v726
        %v735 = vmul.f32 %v658, %v727
        %v736 = vmul.f32 %v660, %v728
        %v737 = vmul.f32 %v662, %v729
        %v738 = vmul.f32 %v664, %v730
        %v739 = vmul.f32 %v666, %v731
        %v740 = vmul.f32 %v668, %v732
        %v741 = vpack.c.bf16 %v733, %v733
        %v742 = vpack.c.bf16 %v734, %v734
        %v743 = vpack.c.bf16 %v735, %v735
        %v744 = vpack.c.bf16 %v736, %v736
        %v745 = vpack.c.bf16 %v737, %v737
        %v746 = vpack.c.bf16 %v738, %v738
        %v747 = vpack.c.bf16 %v739, %v739
        %v748 = vpack.c.bf16 %v740, %v740
        %749 = vxpose.xlu0.c.b16.start [1/8] %v741, 128
        %750 = vxpose.xlu0.c.b16.cont [2/8] 0, 128
        %751 = vxpose.xlu0.c.b16.cont [3/8] 0, 128
        %752 = vxpose.xlu0.c.b16.cont [4/8] 0, 128
        %753 = vxpose.xlu0.c.b16.cont [5/8] 0, 128
        %754 = vxpose.xlu0.c.b16.cont [6/8] 0, 128
        %755 = vxpose.xlu0.c.b16.cont [7/8] 0, 128
        %756 = vxpose.xlu0.c.b16.end [8/8] 0, 128
        %v757 = vpop.trf.xlu0
        %v758 = vpop.trf.xlu0
        %v759 = vpop.trf.xlu0
        %v760 = vpop.trf.xlu0
        %v761 = vpop.trf.xlu0
        %v762 = vpop.trf.xlu0
        %v763 = vpop.trf.xlu0
        %v764 = vpop.trf.xlu0
        %vm765 = vcmask 64512
        %v767 = vsel %vm765, %v757, 0
        %vm769 = vcmask 1043456
        %v771 = vsel %vm769, %v288, 0
        %773 = vmatprep.subr.bf16.mxu0 0
        %774 = vmatpush1.bf16.msra.mxu0 %v771
        %775 = vmatprep.subr.bf16.mxu0 0
        %776 = vmatpush1.bf16.msra.mxu0 0
        %777 = vmatprep.subr.bf16.mxu0 0
        %778 = vmatpush1.bf16.msra.mxu0 0
        %779 = vmatprep.subr.bf16.mxu0 0
        %780 = vmatpush1.bf16.msra.mxu0 0
        %781 = vmatprep.subr.bf16.mxu0 0
        %782 = vmatpush1.bf16.msra.mxu0 0
        %783 = vmatprep.subr.bf16.mxu0 0
        %784 = vmatpush1.bf16.msra.mxu0 0
        %785 = vmatprep.subr.bf16.mxu0 0
        %786 = vmatpush1.bf16.msra.mxu0 0
        %787 = vmatprep.subr.bf16.mxu0 0
        %788 = vmatpush1.bf16.msra.mxu0 0
        %789 = vmatprep.subr.bf16.mxu0 0
        %790 = vmatpush1.bf16.msra.mxu0 0
        %791 = vmatprep.subr.bf16.mxu0 0
        %792 = vmatpush1.bf16.msra.mxu0 0
        %793 = vmatprep.subr.bf16.mxu0 0
        %794 = vmatpush1.bf16.msra.mxu0 0
        %795 = vmatprep.subr.bf16.mxu0 0
        %796 = vmatpush1.bf16.msra.mxu0 0
        %797 = vmatprep.subr.bf16.mxu0 0
        %798 = vmatpush1.bf16.msra.mxu0 0
        %799 = vmatprep.subr.bf16.mxu0 0
        %800 = vmatpush1.bf16.msra.mxu0 0
        %801 = vmatprep.subr.bf16.mxu0 0
        %802 = vmatpush1.bf16.msra.mxu0 0
        %803 = vmatprep.subr.bf16.mxu0 0
        %804 = vmatpush1.bf16.msra.mxu0 0
        %805 = vmatprep.mubr.bf16.mxu0 0
        %806 = vmatmul.mubr.bf16.gmra.mrb[0].mxu0 %v767
        %v807 = vpop.f32.mrb[0].mxu0
        %v808 = vadd.f32 0.0, %v807
        %v809 = vpop.f32.mrb[0].mxu0
        %v810 = vpop.f32.mrb[0].mxu0
        %v811 = vadd.f32 0.0, %v810
        %v812 = vpop.f32.mrb[0].mxu0
        %813 = vdwg.mxu0
        %814 = vxpose.xlu0.c.b16.start [1/8] %v742, 128
        %815 = vxpose.xlu0.c.b16.cont [2/8] 0, 128
        %816 = vxpose.xlu0.c.b16.cont [3/8] 0, 128
        %817 = vxpose.xlu0.c.b16.cont [4/8] 0, 128
        %818 = vxpose.xlu0.c.b16.cont [5/8] 0, 128
        %819 = vxpose.xlu0.c.b16.cont [6/8] 0, 128
        %820 = vxpose.xlu0.c.b16.cont [7/8] 0, 128
        %821 = vxpose.xlu0.c.b16.end [8/8] 0, 128
        %v822 = vpop.trf.xlu0
        %v823 = vpop.trf.xlu0
        %v824 = vpop.trf.xlu0
        %v825 = vpop.trf.xlu0
        %v826 = vpop.trf.xlu0
        %v827 = vpop.trf.xlu0
        %v828 = vpop.trf.xlu0
        %v829 = vpop.trf.xlu0
        %v831 = vsel %vm765, %v822, 0
        %v834 = vsel %vm769, %v289, 0
        %836 = vmatprep.subr.bf16.mxu0 0
        %837 = vmatpush1.bf16.msra.mxu0 %v834
        %838 = vmatprep.subr.bf16.mxu0 0
        %839 = vmatpush1.bf16.msra.mxu0 0
        %840 = vmatprep.subr.bf16.mxu0 0
        %841 = vmatpush1.bf16.msra.mxu0 0
        %842 = vmatprep.subr.bf16.mxu0 0
        %843 = vmatpush1.bf16.msra.mxu0 0
        %844 = vmatprep.subr.bf16.mxu0 0
        %845 = vmatpush1.bf16.msra.mxu0 0
        %846 = vmatprep.subr.bf16.mxu0 0
        %847 = vmatpush1.bf16.msra.mxu0 0
        %848 = vmatprep.subr.bf16.mxu0 0
        %849 = vmatpush1.bf16.msra.mxu0 0
        %850 = vmatprep.subr.bf16.mxu0 0
        %851 = vmatpush1.bf16.msra.mxu0 0
        %852 = vmatprep.subr.bf16.mxu0 0
        %853 = vmatpush1.bf16.msra.mxu0 0
        %854 = vmatprep.subr.bf16.mxu0 0
        %855 = vmatpush1.bf16.msra.mxu0 0
        %856 = vmatprep.subr.bf16.mxu0 0
        %857 = vmatpush1.bf16.msra.mxu0 0
        %858 = vmatprep.subr.bf16.mxu0 0
        %859 = vmatpush1.bf16.msra.mxu0 0
        %860 = vmatprep.subr.bf16.mxu0 0
        %861 = vmatpush1.bf16.msra.mxu0 0
        %862 = vmatprep.subr.bf16.mxu0 0
        %863 = vmatpush1.bf16.msra.mxu0 0
        %864 = vmatprep.subr.bf16.mxu0 0
        %865 = vmatpush1.bf16.msra.mxu0 0
        %866 = vmatprep.subr.bf16.mxu0 0
        %867 = vmatpush1.bf16.msra.mxu0 0
        %868 = vmatprep.mubr.bf16.mxu0 0
        %869 = vmatmul.mubr.bf16.gmra.mrb[0].mxu0 %v831
        %v870 = vpop.f32.mrb[0].mxu0
        %v871 = vadd.f32 0.0, %v870
        %v872 = vpop.f32.mrb[0].mxu0
        %v873 = vpop.f32.mrb[0].mxu0
        %v874 = vadd.f32 0.0, %v873
        %v875 = vpop.f32.mrb[0].mxu0
        %876 = vdwg.mxu0
        %877 = vxpose.xlu0.c.b16.start [1/8] %v743, 128
        %878 = vxpose.xlu0.c.b16.cont [2/8] 0, 128
        %879 = vxpose.xlu0.c.b16.cont [3/8] 0, 128
        %880 = vxpose.xlu0.c.b16.cont [4/8] 0, 128
        %881 = vxpose.xlu0.c.b16.cont [5/8] 0, 128
        %882 = vxpose.xlu0.c.b16.cont [6/8] 0, 128
        %883 = vxpose.xlu0.c.b16.cont [7/8] 0, 128
        %884 = vxpose.xlu0.c.b16.end [8/8] 0, 128
        %v885 = vpop.trf.xlu0
        %v886 = vpop.trf.xlu0
        %v887 = vpop.trf.xlu0
        %v888 = vpop.trf.xlu0
        %v889 = vpop.trf.xlu0
        %v890 = vpop.trf.xlu0
        %v891 = vpop.trf.xlu0
        %v892 = vpop.trf.xlu0
        %v894 = vsel %vm765, %v885, 0
        %v897 = vsel %vm769, %v290, 0
        %899 = vmatprep.subr.bf16.mxu0 0
        %900 = vmatpush1.bf16.msra.mxu0 %v897
        %901 = vmatprep.subr.bf16.mxu0 0
        %902 = vmatpush1.bf16.msra.mxu0 0
        %903 = vmatprep.subr.bf16.mxu0 0
        %904 = vmatpush1.bf16.msra.mxu0 0
        %905 = vmatprep.subr.bf16.mxu0 0
        %906 = vmatpush1.bf16.msra.mxu0 0
        %907 = vmatprep.subr.bf16.mxu0 0
        %908 = vmatpush1.bf16.msra.mxu0 0
        %909 = vmatprep.subr.bf16.mxu0 0
        %910 = vmatpush1.bf16.msra.mxu0 0
        %911 = vmatprep.subr.bf16.mxu0 0
        %912 = vmatpush1.bf16.msra.mxu0 0
        %913 = vmatprep.subr.bf16.mxu0 0
        %914 = vmatpush1.bf16.msra.mxu0 0
        %915 = vmatprep.subr.bf16.mxu0 0
        %916 = vmatpush1.bf16.msra.mxu0 0
        %917 = vmatprep.subr.bf16.mxu0 0
        %918 = vmatpush1.bf16.msra.mxu0 0
        %919 = vmatprep.subr.bf16.mxu0 0
        %920 = vmatpush1.bf16.msra.mxu0 0
        %921 = vmatprep.subr.bf16.mxu0 0
        %922 = vmatpush1.bf16.msra.mxu0 0
        %923 = vmatprep.subr.bf16.mxu0 0
        %924 = vmatpush1.bf16.msra.mxu0 0
        %925 = vmatprep.subr.bf16.mxu0 0
        %926 = vmatpush1.bf16.msra.mxu0 0
        %927 = vmatprep.subr.bf16.mxu0 0
        %928 = vmatpush1.bf16.msra.mxu0 0
        %929 = vmatprep.subr.bf16.mxu0 0
        %930 = vmatpush1.bf16.msra.mxu0 0
        %931 = vmatprep.mubr.bf16.mxu0 0
        %932 = vmatmul.mubr.bf16.gmra.mrb[0].mxu0 %v894
        %v933 = vpop.f32.mrb[0].mxu0
        %v934 = vadd.f32 0.0, %v933
        %v935 = vpop.f32.mrb[0].mxu0
        %v936 = vpop.f32.mrb[0].mxu0
        %v937 = vadd.f32 0.0, %v936
        %v938 = vpop.f32.mrb[0].mxu0
        %939 = vdwg.mxu0
        %940 = vxpose.xlu0.c.b16.start [1/8] %v744, 128
        %941 = vxpose.xlu0.c.b16.cont [2/8] 0, 128
        %942 = vxpose.xlu0.c.b16.cont [3/8] 0, 128
        %943 = vxpose.xlu0.c.b16.cont [4/8] 0, 128
        %944 = vxpose.xlu0.c.b16.cont [5/8] 0, 128
        %945 = vxpose.xlu0.c.b16.cont [6/8] 0, 128
        %946 = vxpose.xlu0.c.b16.cont [7/8] 0, 128
        %947 = vxpose.xlu0.c.b16.end [8/8] 0, 128
        %v948 = vpop.trf.xlu0
        %v949 = vpop.trf.xlu0
        %v950 = vpop.trf.xlu0
        %v951 = vpop.trf.xlu0
        %v952 = vpop.trf.xlu0
        %v953 = vpop.trf.xlu0
        %v954 = vpop.trf.xlu0
        %v955 = vpop.trf.xlu0
        %v957 = vsel %vm765, %v948, 0
        %v960 = vsel %vm769, %v291, 0
        %962 = vmatprep.subr.bf16.mxu0 0
        %963 = vmatpush1.bf16.msra.mxu0 %v960
        %964 = vmatprep.subr.bf16.mxu0 0
        %965 = vmatpush1.bf16.msra.mxu0 0
        %966 = vmatprep.subr.bf16.mxu0 0
        %967 = vmatpush1.bf16.msra.mxu0 0
        %968 = vmatprep.subr.bf16.mxu0 0
        %969 = vmatpush1.bf16.msra.mxu0 0
        %970 = vmatprep.subr.bf16.mxu0 0
        %971 = vmatpush1.bf16.msra.mxu0 0
        %972 = vmatprep.subr.bf16.mxu0 0
        %973 = vmatpush1.bf16.msra.mxu0 0
        %974 = vmatprep.subr.bf16.mxu0 0
        %975 = vmatpush1.bf16.msra.mxu0 0
        %976 = vmatprep.subr.bf16.mxu0 0
        %977 = vmatpush1.bf16.msra.mxu0 0
        %978 = vmatprep.subr.bf16.mxu0 0
        %979 = vmatpush1.bf16.msra.mxu0 0
        %980 = vmatprep.subr.bf16.mxu0 0
        %981 = vmatpush1.bf16.msra.mxu0 0
        %982 = vmatprep.subr.bf16.mxu0 0
        %983 = vmatpush1.bf16.msra.mxu0 0
        %984 = vmatprep.subr.bf16.mxu0 0
        %985 = vmatpush1.bf16.msra.mxu0 0
        %986 = vmatprep.subr.bf16.mxu0 0
        %987 = vmatpush1.bf16.msra.mxu0 0
        %988 = vmatprep.subr.bf16.mxu0 0
        %989 = vmatpush1.bf16.msra.mxu0 0
        %990 = vmatprep.subr.bf16.mxu0 0
        %991 = vmatpush1.bf16.msra.mxu0 0
        %992 = vmatprep.subr.bf16.mxu0 0
        %993 = vmatpush1.bf16.msra.mxu0 0
        %994 = vmatprep.mubr.bf16.mxu0 0
        %995 = vmatmul.mubr.bf16.gmra.mrb[0].mxu0 %v957
        %v996 = vpop.f32.mrb[0].mxu0
        %v997 = vadd.f32 0.0, %v996
        %v998 = vpop.f32.mrb[0].mxu0
        %v999 = vpop.f32.mrb[0].mxu0
        %v1000 = vadd.f32 0.0, %v999
        %v1001 = vpop.f32.mrb[0].mxu0
        %1002 = vdwg.mxu0
        %1003 = vxpose.xlu0.c.b16.start [1/8] %v745, 128
        %1004 = vxpose.xlu0.c.b16.cont [2/8] 0, 128
        %1005 = vxpose.xlu0.c.b16.cont [3/8] 0, 128
        %1006 = vxpose.xlu0.c.b16.cont [4/8] 0, 128
        %1007 = vxpose.xlu0.c.b16.cont [5/8] 0, 128
        %1008 = vxpose.xlu0.c.b16.cont [6/8] 0, 128
        %1009 = vxpose.xlu0.c.b16.cont [7/8] 0, 128
        %1010 = vxpose.xlu0.c.b16.end [8/8] 0, 128
        %v1011 = vpop.trf.xlu0
        %v1012 = vpop.trf.xlu0
        %v1013 = vpop.trf.xlu0
        %v1014 = vpop.trf.xlu0
        %v1015 = vpop.trf.xlu0
        %v1016 = vpop.trf.xlu0
        %v1017 = vpop.trf.xlu0
        %v1018 = vpop.trf.xlu0
        %v1020 = vsel %vm765, %v1011, 0
        %v1023 = vsel %vm769, %v292, 0
        %1025 = vmatprep.subr.bf16.mxu0 0
        %1026 = vmatpush1.bf16.msra.mxu0 %v1023
        %1027 = vmatprep.subr.bf16.mxu0 0
        %1028 = vmatpush1.bf16.msra.mxu0 0
        %1029 = vmatprep.subr.bf16.mxu0 0
        %1030 = vmatpush1.bf16.msra.mxu0 0
        %1031 = vmatprep.subr.bf16.mxu0 0
        %1032 = vmatpush1.bf16.msra.mxu0 0
        %1033 = vmatprep.subr.bf16.mxu0 0
        %1034 = vmatpush1.bf16.msra.mxu0 0
        %1035 = vmatprep.subr.bf16.mxu0 0
        %1036 = vmatpush1.bf16.msra.mxu0 0
        %1037 = vmatprep.subr.bf16.mxu0 0
        %1038 = vmatpush1.bf16.msra.mxu0 0
        %1039 = vmatprep.subr.bf16.mxu0 0
        %1040 = vmatpush1.bf16.msra.mxu0 0
        %1041 = vmatprep.subr.bf16.mxu0 0
        %1042 = vmatpush1.bf16.msra.mxu0 0
        %1043 = vmatprep.subr.bf16.mxu0 0
        %1044 = vmatpush1.bf16.msra.mxu0 0
        %1045 = vmatprep.subr.bf16.mxu0 0
        %1046 = vmatpush1.bf16.msra.mxu0 0
        %1047 = vmatprep.subr.bf16.mxu0 0
        %1048 = vmatpush1.bf16.msra.mxu0 0
        %1049 = vmatprep.subr.bf16.mxu0 0
        %1050 = vmatpush1.bf16.msra.mxu0 0
        %1051 = vmatprep.subr.bf16.mxu0 0
        %1052 = vmatpush1.bf16.msra.mxu0 0
        %1053 = vmatprep.subr.bf16.mxu0 0
        %1054 = vmatpush1.bf16.msra.mxu0 0
        %1055 = vmatprep.subr.bf16.mxu0 0
        %1056 = vmatpush1.bf16.msra.mxu0 0
        %1057 = vmatprep.mubr.bf16.mxu0 0
        %1058 = vmatmul.mubr.bf16.gmra.mrb[0].mxu0 %v1020
        %v1059 = vpop.f32.mrb[0].mxu0
        %v1060 = vadd.f32 0.0, %v1059
        %v1061 = vpop.f32.mrb[0].mxu0
        %v1062 = vpop.f32.mrb[0].mxu0
        %v1063 = vadd.f32 0.0, %v1062
        %v1064 = vpop.f32.mrb[0].mxu0
        %1065 = vdwg.mxu0
        %1066 = vxpose.xlu0.c.b16.start [1/8] %v746, 128
        %1067 = vxpose.xlu0.c.b16.cont [2/8] 0, 128
        %1068 = vxpose.xlu0.c.b16.cont [3/8] 0, 128
        %1069 = vxpose.xlu0.c.b16.cont [4/8] 0, 128
        %1070 = vxpose.xlu0.c.b16.cont [5/8] 0, 128
        %1071 = vxpose.xlu0.c.b16.cont [6/8] 0, 128
        %1072 = vxpose.xlu0.c.b16.cont [7/8] 0, 128
        %1073 = vxpose.xlu0.c.b16.end [8/8] 0, 128
        %v1074 = vpop.trf.xlu0
        %v1075 = vpop.trf.xlu0
        %v1076 = vpop.trf.xlu0
        %v1077 = vpop.trf.xlu0
        %v1078 = vpop.trf.xlu0
        %v1079 = vpop.trf.xlu0
        %v1080 = vpop.trf.xlu0
        %v1081 = vpop.trf.xlu0
        %v1083 = vsel %vm765, %v1074, 0
        %v1086 = vsel %vm769, %v293, 0
        %1088 = vmatprep.subr.bf16.mxu0 0
        %1089 = vmatpush1.bf16.msra.mxu0 %v1086
        %1090 = vmatprep.subr.bf16.mxu0 0
        %1091 = vmatpush1.bf16.msra.mxu0 0
        %1092 = vmatprep.subr.bf16.mxu0 0
        %1093 = vmatpush1.bf16.msra.mxu0 0
        %1094 = vmatprep.subr.bf16.mxu0 0
        %1095 = vmatpush1.bf16.msra.mxu0 0
        %1096 = vmatprep.subr.bf16.mxu0 0
        %1097 = vmatpush1.bf16.msra.mxu0 0
        %1098 = vmatprep.subr.bf16.mxu0 0
        %1099 = vmatpush1.bf16.msra.mxu0 0
        %1100 = vmatprep.subr.bf16.mxu0 0
        %1101 = vmatpush1.bf16.msra.mxu0 0
        %1102 = vmatprep.subr.bf16.mxu0 0
        %1103 = vmatpush1.bf16.msra.mxu0 0
        %1104 = vmatprep.subr.bf16.mxu0 0
        %1105 = vmatpush1.bf16.msra.mxu0 0
        %1106 = vmatprep.subr.bf16.mxu0 0
        %1107 = vmatpush1.bf16.msra.mxu0 0
        %1108 = vmatprep.subr.bf16.mxu0 0
        %1109 = vmatpush1.bf16.msra.mxu0 0
        %1110 = vmatprep.subr.bf16.mxu0 0
        %1111 = vmatpush1.bf16.msra.mxu0 0
        %1112 = vmatprep.subr.bf16.mxu0 0
        %1113 = vmatpush1.bf16.msra.mxu0 0
        %1114 = vmatprep.subr.bf16.mxu0 0
        %1115 = vmatpush1.bf16.msra.mxu0 0
        %1116 = vmatprep.subr.bf16.mxu0 0
        %1117 = vmatpush1.bf16.msra.mxu0 0
        %1118 = vmatprep.subr.bf16.mxu0 0
        %1119 = vmatpush1.bf16.msra.mxu0 0
        %1120 = vmatprep.mubr.bf16.mxu0 0
        %1121 = vmatmul.mubr.bf16.gmra.mrb[0].mxu0 %v1083
        %v1122 = vpop.f32.mrb[0].mxu0
        %v1123 = vadd.f32 0.0, %v1122
        %v1124 = vpop.f32.mrb[0].mxu0
        %v1125 = vpop.f32.mrb[0].mxu0
        %v1126 = vadd.f32 0.0, %v1125
        %v1127 = vpop.f32.mrb[0].mxu0
        %1128 = vdwg.mxu0
        %1129 = vxpose.xlu0.c.b16.start [1/8] %v747, 128
        %1130 = vxpose.xlu0.c.b16.cont [2/8] 0, 128
        %1131 = vxpose.xlu0.c.b16.cont [3/8] 0, 128
        %1132 = vxpose.xlu0.c.b16.cont [4/8] 0, 128
        %1133 = vxpose.xlu0.c.b16.cont [5/8] 0, 128
        %1134 = vxpose.xlu0.c.b16.cont [6/8] 0, 128
        %1135 = vxpose.xlu0.c.b16.cont [7/8] 0, 128
        %1136 = vxpose.xlu0.c.b16.end [8/8] 0, 128
        %v1137 = vpop.trf.xlu0
        %v1138 = vpop.trf.xlu0
        %v1139 = vpop.trf.xlu0
        %v1140 = vpop.trf.xlu0
        %v1141 = vpop.trf.xlu0
        %v1142 = vpop.trf.xlu0
        %v1143 = vpop.trf.xlu0
        %v1144 = vpop.trf.xlu0
        %v1146 = vsel %vm765, %v1137, 0
        %v1149 = vsel %vm769, %v294, 0
        %1151 = vmatprep.subr.bf16.mxu0 0
        %1152 = vmatpush1.bf16.msra.mxu0 %v1149
        %1153 = vmatprep.subr.bf16.mxu0 0
        %1154 = vmatpush1.bf16.msra.mxu0 0
        %1155 = vmatprep.subr.bf16.mxu0 0
        %1156 = vmatpush1.bf16.msra.mxu0 0
        %1157 = vmatprep.subr.bf16.mxu0 0
        %1158 = vmatpush1.bf16.msra.mxu0 0
        %1159 = vmatprep.subr.bf16.mxu0 0
        %1160 = vmatpush1.bf16.msra.mxu0 0
        %1161 = vmatprep.subr.bf16.mxu0 0
        %1162 = vmatpush1.bf16.msra.mxu0 0
        %1163 = vmatprep.subr.bf16.mxu0 0
        %1164 = vmatpush1.bf16.msra.mxu0 0
        %1165 = vmatprep.subr.bf16.mxu0 0
        %1166 = vmatpush1.bf16.msra.mxu0 0
        %1167 = vmatprep.subr.bf16.mxu0 0
        %1168 = vmatpush1.bf16.msra.mxu0 0
        %1169 = vmatprep.subr.bf16.mxu0 0
        %1170 = vmatpush1.bf16.msra.mxu0 0
        %1171 = vmatprep.subr.bf16.mxu0 0
        %1172 = vmatpush1.bf16.msra.mxu0 0
        %1173 = vmatprep.subr.bf16.mxu0 0
        %1174 = vmatpush1.bf16.msra.mxu0 0
        %1175 = vmatprep.subr.bf16.mxu0 0
        %1176 = vmatpush1.bf16.msra.mxu0 0
        %1177 = vmatprep.subr.bf16.mxu0 0
        %1178 = vmatpush1.bf16.msra.mxu0 0
        %1179 = vmatprep.subr.bf16.mxu0 0
        %1180 = vmatpush1.bf16.msra.mxu0 0
        %1181 = vmatprep.subr.bf16.mxu0 0
        %1182 = vmatpush1.bf16.msra.mxu0 0
        %1183 = vmatprep.mubr.bf16.mxu0 0
        %1184 = vmatmul.mubr.bf16.gmra.mrb[0].mxu0 %v1146
        %v1185 = vpop.f32.mrb[0].mxu0
        %v1186 = vadd.f32 0.0, %v1185
        %v1187 = vpop.f32.mrb[0].mxu0
        %v1188 = vpop.f32.mrb[0].mxu0
        %v1189 = vadd.f32 0.0, %v1188
        %v1190 = vpop.f32.mrb[0].mxu0
        %1191 = vdwg.mxu0
        %1192 = vxpose.xlu0.c.b16.start [1/8] %v748, 128
        %1193 = vxpose.xlu0.c.b16.cont [2/8] 0, 128
        %1194 = vxpose.xlu0.c.b16.cont [3/8] 0, 128
        %1195 = vxpose.xlu0.c.b16.cont [4/8] 0, 128
        %1196 = vxpose.xlu0.c.b16.cont [5/8] 0, 128
        %1197 = vxpose.xlu0.c.b16.cont [6/8] 0, 128
        %1198 = vxpose.xlu0.c.b16.cont [7/8] 0, 128
        %1199 = vxpose.xlu0.c.b16.end [8/8] 0, 128
        %v1200 = vpop.trf.xlu0
        %v1201 = vpop.trf.xlu0
        %v1202 = vpop.trf.xlu0
        %v1203 = vpop.trf.xlu0
        %v1204 = vpop.trf.xlu0
        %v1205 = vpop.trf.xlu0
        %v1206 = vpop.trf.xlu0
        %v1207 = vpop.trf.xlu0
        %v1209 = vsel %vm765, %v1200, 0
        %v1212 = vsel %vm769, %v295, 0
        %1214 = vmatprep.subr.bf16.mxu0 0
        %1215 = vmatpush1.bf16.msra.mxu0 %v1212
        %1216 = vmatprep.subr.bf16.mxu0 0
        %1217 = vmatpush1.bf16.msra.mxu0 0
        %1218 = vmatprep.subr.bf16.mxu0 0
        %1219 = vmatpush1.bf16.msra.mxu0 0
        %1220 = vmatprep.subr.bf16.mxu0 0
        %1221 = vmatpush1.bf16.msra.mxu0 0
        %1222 = vmatprep.subr.bf16.mxu0 0
        %1223 = vmatpush1.bf16.msra.mxu0 0
        %1224 = vmatprep.subr.bf16.mxu0 0
        %1225 = vmatpush1.bf16.msra.mxu0 0
        %1226 = vmatprep.subr.bf16.mxu0 0
        %1227 = vmatpush1.bf16.msra.mxu0 0
        %1228 = vmatprep.subr.bf16.mxu0 0
        %1229 = vmatpush1.bf16.msra.mxu0 0
        %1230 = vmatprep.subr.bf16.mxu0 0
        %1231 = vmatpush1.bf16.msra.mxu0 0
        %1232 = vmatprep.subr.bf16.mxu0 0
        %1233 = vmatpush1.bf16.msra.mxu0 0
        %1234 = vmatprep.subr.bf16.mxu0 0
        %1235 = vmatpush1.bf16.msra.mxu0 0
        %1236 = vmatprep.subr.bf16.mxu0 0
        %1237 = vmatpush1.bf16.msra.mxu0 0
        %1238 = vmatprep.subr.bf16.mxu0 0
        %1239 = vmatpush1.bf16.msra.mxu0 0
        %1240 = vmatprep.subr.bf16.mxu0 0
        %1241 = vmatpush1.bf16.msra.mxu0 0
        %1242 = vmatprep.subr.bf16.mxu0 0
        %1243 = vmatpush1.bf16.msra.mxu0 0
        %1244 = vmatprep.subr.bf16.mxu0 0
        %1245 = vmatpush1.bf16.msra.mxu0 0
        %1246 = vmatprep.mubr.bf16.mxu0 0
        %1247 = vmatmul.mubr.bf16.gmra.mrb[0].mxu0 %v1209
        %v1248 = vpop.f32.mrb[0].mxu0
        %v1249 = vadd.f32 0.0, %v1248
        %v1250 = vpop.f32.mrb[0].mxu0
        %v1251 = vpop.f32.mrb[0].mxu0
        %v1252 = vadd.f32 0.0, %v1251
        %v1253 = vpop.f32.mrb[0].mxu0
        %1254 = vdwg.mxu0
        %v1255 = vsel %vm332, %v808, -inf
        %v1256 = vsel %vm332, %v811, -inf
        %v1257 = vmax.f32 %v1255, %v1256
        %v1258 = vrot.slane %v1257, 4
        %v1259 = vmax.f32 %v1257, %v1258
        %v1260 = vrot.slane %v1259, 2
        %v1261 = vmax.f32 %v1259, %v1260
        %v1262 = vrot.slane %v1261, 1
        %v1263 = vmax.f32 %v1261, %v1262
        %v1264 = vsel %vm332, %v871, -inf
        %v1265 = vsel %vm332, %v874, -inf
        %v1266 = vmax.f32 %v1264, %v1265
        %v1267 = vrot.slane %v1266, 4
        %v1268 = vmax.f32 %v1266, %v1267
        %v1269 = vrot.slane %v1268, 2
        %v1270 = vmax.f32 %v1268, %v1269
        %v1271 = vrot.slane %v1270, 1
        %v1272 = vmax.f32 %v1270, %v1271
        %v1273 = vsel %vm332, %v934, -inf
        %v1274 = vsel %vm332, %v937, -inf
        %v1275 = vmax.f32 %v1273, %v1274
        %v1276 = vrot.slane %v1275, 4
        %v1277 = vmax.f32 %v1275, %v1276
        %v1278 = vrot.slane %v1277, 2
        %v1279 = vmax.f32 %v1277, %v1278
        %v1280 = vrot.slane %v1279, 1
        %v1281 = vmax.f32 %v1279, %v1280
        %v1282 = vsel %vm332, %v997, -inf
        %v1283 = vsel %vm332, %v1000, -inf
        %v1284 = vmax.f32 %v1282, %v1283
        %v1285 = vrot.slane %v1284, 4
        %v1286 = vmax.f32 %v1284, %v1285
        %v1287 = vrot.slane %v1286, 2
        %v1288 = vmax.f32 %v1286, %v1287
        %v1289 = vrot.slane %v1288, 1
        %v1290 = vmax.f32 %v1288, %v1289
        %v1291 = vsel %vm332, %v1060, -inf
        %v1292 = vsel %vm332, %v1063, -inf
        %v1293 = vmax.f32 %v1291, %v1292
        %v1294 = vrot.slane %v1293, 4
        %v1295 = vmax.f32 %v1293, %v1294
        %v1296 = vrot.slane %v1295, 2
        %v1297 = vmax.f32 %v1295, %v1296
        %v1298 = vrot.slane %v1297, 1
        %v1299 = vmax.f32 %v1297, %v1298
        %v1300 = vsel %vm332, %v1123, -inf
        %v1301 = vsel %vm332, %v1126, -inf
        %v1302 = vmax.f32 %v1300, %v1301
        %v1303 = vrot.slane %v1302, 4
        %v1304 = vmax.f32 %v1302, %v1303
        %v1305 = vrot.slane %v1304, 2
        %v1306 = vmax.f32 %v1304, %v1305
        %v1307 = vrot.slane %v1306, 1
        %v1308 = vmax.f32 %v1306, %v1307
        %v1309 = vsel %vm332, %v1186, -inf
        %v1310 = vsel %vm332, %v1189, -inf
        %v1311 = vmax.f32 %v1309, %v1310
        %v1312 = vrot.slane %v1311, 4
        %v1313 = vmax.f32 %v1311, %v1312
        %v1314 = vrot.slane %v1313, 2
        %v1315 = vmax.f32 %v1313, %v1314
        %v1316 = vrot.slane %v1315, 1
        %v1317 = vmax.f32 %v1315, %v1316
        %v1318 = vsel %vm332, %v1249, -inf
        %v1319 = vsel %vm332, %v1252, -inf
        %v1320 = vmax.f32 %v1318, %v1319
        %v1321 = vrot.slane %v1320, 4
        %v1322 = vmax.f32 %v1320, %v1321
        %v1323 = vrot.slane %v1322, 2
        %v1324 = vmax.f32 %v1322, %v1323
        %v1325 = vrot.slane %v1324, 1
        %v1326 = vmax.f32 %v1324, %v1325
        %vm1335 = vcmask 1041409
        %v1336 = vsel %vm1335, %v1272, %v1263
        %vm1337 = vcmask 1042434
        %v1338 = vsel %vm1337, %v1281, %v1336
        %vm1339 = vcmask 1043459
        %v1340 = vsel %vm1339, %v1290, %v1338
        %vm1341 = vcmask 1044484
        %v1342 = vsel %vm1341, %v1299, %v1340
        %vm1343 = vcmask 1045509
        %v1344 = vsel %vm1343, %v1308, %v1342
        %vm1345 = vcmask 1046534
        %v1346 = vsel %vm1345, %v1317, %v1344
        %vm1347 = vcmask 1047559
        %v1348 = vsel %vm1347, %v1326, %v1346
        %1350 = vst.msk [vmem:[%s284] sm:$0xff] %vm332, %v1348
        %s1351 = sand.u32 %s127, 1
        %s1352 = scalar_lea.sflag [#allocation4], %s1351
        %s1353 = sand.u32 %s127, 1
        %s1354 = smul.addr %s1353, 8
        %s1355 = scalar_lea.vmem [#allocation10], %s1354
        // Predicated region
        $region53: #{tpu_custom_call.1} parent=35 // pred_check
          %p1356 = pneg %p137
        $region54: #{tpu_custom_call.1} parent=35 // pred_check_branch
          %1358 = sbr.rel (%p1356) target = $region56
        $region55: #{tpu_custom_call.1} parent=35 // pred_region
          %s1360 = ssub.s32 128, 128
          %1361 = vsyncadd %s1352, %s1360
          %s1362 = smul.addr %s25, 128
          %s1363 = scalar_lea.hbm %s4, %s1362
          %s1365 = sshll.u32 %s1355, 4
          %s1366 = int_to_ptr.vmem [resolvable:$true] %s1365
          %1368 = dma.vmem_to_hbm [thread:$0]  %s1366, 128, %s1363, %s1352
        $region56: #{tpu_custom_call.1} parent=35 // pred_fallthru
          _
      $region36: #{tpu_custom_call.1} parent=5 // pred_fallthru
        _
      %p1369 = scmp.le.s32.totalorder 2, %s20
      // Predicated region
      $region57: #{tpu_custom_call.1} parent=5 // pred_check
        %p1370 = pneg %p1369
      $region58: #{tpu_custom_call.1} parent=5 // pred_check_branch
        %1372 = sbr.rel (%p1370) target = $region60
      $region59: #{tpu_custom_call.1} parent=5 // pred_region
        %s1373 = ssub.s32 %s20, 2
        // Predicated region
        $region61: #{tpu_custom_call.1} parent=59 // pred_check
          %p1374 = pneg %p143
        $region62: #{tpu_custom_call.1} parent=59 // pred_check_branch
          %1376 = sbr.rel (%p1374) target = $region64
        $region63: #{tpu_custom_call.1} parent=59 // pred_region
          %s1377 = sand.u32 %s128, 1
          %s1378 = scalar_lea.sflag [#allocation4], %s1377
          %s1379 = sand.u32 %s128, 1
          %s1380 = smul.addr %s1379, 8
          %s1381 = scalar_lea.vmem [#allocation10], %s1380
          %1382 = dma.done %s1378, 128
        $region64: #{tpu_custom_call.1} parent=59 // pred_fallthru
          _
      $region60: #{tpu_custom_call.1} parent=5 // pred_fallthru
        _
    $region6: #{tpu_custom_call.1} parent=1 // loop_footer
      %s24 = sadd.s32 1, %s20
    $region7: #{tpu_custom_call.1} parent=1 // loop_footer_branch
      %19 = sbr.rel target = $region3
    $region8: #{tpu_custom_call.1} parent=1 // loop_exit
      _
    %1383 = vsyncpa [#allocation3], 1
    %s1384 = scalar_lea.sflag [#allocation3], 1
    %1385 = vsyncpa %s1384, 1
    %1386 = vsyncpa [#allocation6], 1
    %s1387 = scalar_lea.sflag [#allocation6], 1
    %1388 = vsyncpa %s1387, 1
    %1389 = vsyncpa [#allocation9], 1
    %1390 = vsyncpa [#allocation4], 1
    %s1391 = scalar_lea.sflag [#allocation4], 1
    %1392 = vsyncpa %s1391, 1

</llo_original>
